<compile_context>
chip_gen: v5e
topology: v5e:2x2
jax: 0.10.0
libtpu: 0.0.40
codegen_flags: <defaults>
</compile_context>

<pallas_src>
import jax
import jax.numpy as jnp
from jax.experimental import pallas as pl
from jax.experimental.pallas import tpu as pltpu

_LANE = 128      # TPU lane width
_SUBLANE = 8     # TPU sublane width


def _round_up(n, m):
    return ((n + m - 1) // m) * m


def _pad2d(a, rows, cols):
    r, c = a.shape
    return jnp.pad(a, ((0, rows - r), (0, cols - c)))


def _make_kernel(k_pad, lane, r_b1, r_w2, r_b2, r_w3, r_b3):
    """Kernel with all slab row offsets baked in as static, 8-aligned constants."""

    def kernel(x_ref, slab_ref, o_ref):
        x = x_ref[...]                          # (tile_m, k_pad) gate-folded flat input

        # fc1 (gate weights already folded into w1; padded rows/lanes are zero)
        w1 = slab_ref[0:k_pad, :]               # (k_pad, lane)
        b1 = slab_ref[r_b1:r_b1 + 1, :]         # (1, lane)
        h1 = jnp.maximum(
            jnp.dot(x, w1, preferred_element_type=jnp.float32) + b1, 0.0)

        # fc2 (zero-padded to (lane, lane); padded lanes stay 0 through ReLU)
        w2 = slab_ref[r_w2:r_w2 + lane, :]
        b2 = slab_ref[r_b2:r_b2 + 1, :]
        h2 = jnp.maximum(
            jnp.dot(h1, w2, preferred_element_type=jnp.float32) + b2, 0.0)

        # fc3 (no activation); output is lane-dense, real outputs live in [:O]
        w3 = slab_ref[r_w3:r_w3 + lane, :]
        b3 = slab_ref[r_b3:r_b3 + 1, :]
        o_ref[...] = jnp.dot(h2, w3, preferred_element_type=jnp.float32) + b3

    return kernel


def make_preprocessing_validator(gates, w1, b1, w2, b2, w3, b3, *, tile_m=256):
    """Build the forward once (static packing hoisted out of the call path).

    gates: (T,) f32 gate params G_i;
    w1: (T*F, 64), w2: (64, 32), w3: (32, O) pre-transposed (y = x @ W + b).
    Returns a jitted callable accepting x of shape (T, F) -> (O,) (the module's
    forward) or (B, T, F) -> (B, O) (batched variant, grid over B).
    tile_m: batch tile (multiple of 8; 256 recommended on v6e/v7x, 128 on v5e).
    """
    K, H1 = w1.shape
    T = gates.shape[0]
    F = K // T
    H2 = w2.shape[1]
    O = w3.shape[1]

    lane = max(_LANE, _round_up(O, _LANE))
    k_pad = _round_up(K, _SUBLANE)

    # ---- exact gate math of the PyTorch forward, done ONCE at build time ----
    sig = jax.nn.sigmoid(gates.astype(jnp.float32))
    e = jnp.exp(sig)
    gw = e / jnp.sum(e)                               # (T,)
    gwr = jnp.repeat(gw, F)                           # (K,): gwr[t*F+f] = gw[t]
    w1g = w1.astype(jnp.float32) * gwr[:, None]       # fold gating into fc1

    # ---- pack everything into one zero-padded 128-lane slab (built once) ----
    r_b1 = k_pad
    r_w2 = r_b1 + _SUBLANE
    r_b2 = r_w2 + lane
    r_w3 = r_b2 + _SUBLANE
    r_b3 = r_w3 + lane
    slab_rows = r_b3 + _SUBLANE
    slab = jnp.concatenate([
        _pad2d(w1g, k_pad, lane),                                         # rows [0, k_pad)
        _pad2d(b1.reshape(1, -1).astype(jnp.float32), _SUBLANE, lane),    # row r_b1
        _pad2d(w2.astype(jnp.float32), lane, lane),                       # rows [r_w2, r_w2+lane)
        _pad2d(b2.reshape(1, -1).astype(jnp.float32), _SUBLANE, lane),    # row r_b2
        _pad2d(w3.astype(jnp.float32), lane, lane),                       # rows [r_w3, r_w3+lane)
        _pad2d(b3.reshape(1, -1).astype(jnp.float32), _SUBLANE, lane),    # row r_b3
    ], axis=0)
    slab = jax.device_put(slab)   # materialized once, reused by every call

    kernel = _make_kernel(k_pad, lane, r_b1, r_w2, r_b2, r_w3, r_b3)

    def forward(x):
        single = x.ndim == 2
        xb = x[None] if single else x                 # (B, T, F)
        B = xb.shape[0]

        tm = min(tile_m, _round_up(B, _SUBLANE))      # full-sublane row tile
        m_pad = _round_up(B, tm)

        xf = xb.reshape(B, K).astype(jnp.float32)     # row-major flatten (as PyTorch)
        xf = jnp.pad(xf, ((0, m_pad - B), (0, k_pad - K)))   # (m_pad, k_pad)

        # Advisory cost of the *padded* problem actually executed.
        cost = pl.CostEstimate(
            flops=2 * m_pad * (k_pad * lane + lane * lane + lane * lane),
            transcendentals=0,
            bytes_accessed=int(xf.size + slab.size + m_pad * lane) * 4,
        )

        out = pl.pallas_call(
            kernel,
            out_shape=jax.ShapeDtypeStruct((m_pad, lane), jnp.float32),
            grid_spec=pltpu.PrefetchScalarGridSpec(
                num_scalar_prefetch=0,
                grid=(m_pad // tm,),
                in_specs=[
                    pl.BlockSpec((tm, k_pad), lambda i: (i, 0)),
                    # weight slab: same block for every grid step -> resident in VMEM
                    pl.BlockSpec((slab_rows, lane), lambda i: (0, 0)),
                ],
                out_specs=pl.BlockSpec((tm, lane), lambda i: (i, 0)),
            ),
            compiler_params=pltpu.CompilerParams(
                dimension_semantics=("parallel",)),   # v7x: split batch across TCs
            cost_estimate=cost,
        )(xf, slab)

        out = out[:B, :O]
        return out[0] if single else out

    return jax.jit(forward)


def _ref_forward(x, gates, w1, b1, w2, b2, w3, b3):
    # pure-JAX reference mirroring the PyTorch forward
    sig = jax.nn.sigmoid(gates)
    e = jnp.exp(sig)
    gw = e / jnp.sum(e)
    xg = x * gw[:, None]
    xf = xg.reshape(-1)
    h1 = jax.nn.relu(xf @ w1 + b1)
    h2 = jax.nn.relu(h1 @ w2 + b2)
    return h2 @ w3 + b3


if __name__ == "__main__":
    # small shapes consistent with the module:
    #   num_transformations T = 4, per-transform features F = 8
    #   => num_inputs = T*F = 32 ; num_outputs = 8.
    T, F = 4, 8
    num_inputs = T * F
    num_outputs = 8

    key = jax.random.PRNGKey(0)
    k1, k2, k3, k4, k5, k6, kx, kb = jax.random.split(key, 8)

    def uinit(k, shape, fan_in):
        bound = 1.0 / jnp.sqrt(fan_in)
        return jax.random.uniform(k, shape, jnp.float32, -bound, bound)

    # Linear weights stored pre-transposed: y = x @ W + b
    w1 = uinit(k1, (num_inputs, 64), num_inputs)
    b1 = uinit(k2, (64,), num_inputs)
    w2 = uinit(k3, (64, 32), 64)
    b2 = uinit(k4, (32,), 64)
    w3 = uinit(k5, (32, num_outputs), 32)
    b3 = uinit(k6, (num_outputs,), 32)

    # gate params G_i initialized to ones, like torch.nn.Parameter(torch.ones(1))
    gates = jnp.ones((T,), jnp.float32)

    # ---- single-sample forward (exactly the module's forward signature) ----
    fwd = make_preprocessing_validator(gates, w1, b1, w2, b2, w3, b3)
    x = jax.random.normal(kx, (T, F), jnp.float32)
    out = jax.block_until_ready(fwd(x))
    ref = _ref_forward(x, gates, w1, b1, w2, b2, w3, b3)
    assert out.shape == (num_outputs,)
    assert jnp.allclose(out, ref, atol=1e-5, rtol=1e-5), (out, ref)

    # ---- batched variant: multi-step grid over M with the slab resident ----
    # tile_m=8 here only to exercise several grid steps at this tiny demo batch;
    # production default is 256 (v6e/v7x) / 128 (v5e).
    B = 20
    fwd_b = make_preprocessing_validator(gates, w1, b1, w2, b2, w3, b3, tile_m=8)
    xb = jax.random.normal(kb, (B, T, F), jnp.float32)
    outb = jax.block_until_ready(fwd_b(xb))
    refb = jax.vmap(lambda xi: _ref_forward(xi, gates, w1, b1, w2, b2, w3, b3))(xb)
    assert outb.shape == (B, num_outputs)
    assert jnp.allclose(outb, refb, atol=1e-5, rtol=1e-5), (outb, refb)

    print("KERNEL_OK")
</pallas_src>

<mosaic_0001>
module attributes {stable_mosaic.version = 11 : i64} {
  func.func @kernel(%arg0: i32, %arg1: memref<8x32xf32, #tpu.memory_space<vmem>>, %arg2: memref<312x128xf32, #tpu.memory_space<vmem>>, %arg3: memref<8x128xf32, #tpu.memory_space<vmem>>) attributes {dimension_semantics = [#tpu.dimension_semantics<parallel>], iteration_bounds = array<i64: 1>, scalar_prefetch = 0 : i64, scratch_operands = 0 : i64, tpu.core_type = #tpu.core_type<tc>, window_params = [{transform_indices = @transform_0, window_bounds = array<i64: 8, 32>}, {pipeline_mode = #tpu.pipeline_mode<synchronous>, transform_indices = @transform_1, window_bounds = array<i64: 312, 128>}, {transform_indices = @transform_2, window_bounds = array<i64: 8, 128>}]} {
    %c0 = arith.constant 0 : index
    %c0_0 = arith.constant 0 : index
    %0 = vector.load %arg1[%c0, %c0_0] : memref<8x32xf32, #tpu.memory_space<vmem>>, vector<8x32xf32>
    %c0_1 = arith.constant 0 : index
    %c0_2 = arith.constant 0 : index
    %1 = vector.load %arg2[%c0_1, %c0_2] : memref<312x128xf32, #tpu.memory_space<vmem>>, vector<32x128xf32>
    %c32 = arith.constant 32 : index
    %c0_3 = arith.constant 0 : index
    %2 = vector.load %arg2[%c32, %c0_3] : memref<312x128xf32, #tpu.memory_space<vmem>>, vector<1x128xf32>
    %cst = arith.constant dense<0.000000e+00> : vector<8x128xf32>
    %3 = tpu.matmul %0, %1, %cst {dimension_numbers = #tpu.dot_dimension_numbers<[1], [0], [0], [1], [0, 0, 1, 1], [], []>} : vector<8x32xf32>, vector<32x128xf32>, vector<8x128xf32> -> vector<8x128xf32>
    %4 = vector.broadcast %2 : vector<1x128xf32> to vector<8x128xf32>
    %5 = arith.addf %3, %4 : vector<8x128xf32>
    %cst_4 = arith.constant 0.000000e+00 : f32
    %6 = vector.broadcast %cst_4 : f32 to vector<8x128xf32>
    %7 = arith.maximumf %5, %6 : vector<8x128xf32>
    %c40 = arith.constant 40 : index
    %c0_5 = arith.constant 0 : index
    %8 = vector.load %arg2[%c40, %c0_5] : memref<312x128xf32, #tpu.memory_space<vmem>>, vector<128x128xf32>
    %c168 = arith.constant 168 : index
    %c0_6 = arith.constant 0 : index
    %9 = vector.load %arg2[%c168, %c0_6] : memref<312x128xf32, #tpu.memory_space<vmem>>, vector<1x128xf32>
    %cst_7 = arith.constant dense<0.000000e+00> : vector<8x128xf32>
    %10 = tpu.matmul %7, %8, %cst_7 {dimension_numbers = #tpu.dot_dimension_numbers<[1], [0], [0], [1], [0, 0, 1, 1], [], []>} : vector<8x128xf32>, vector<128x128xf32>, vector<8x128xf32> -> vector<8x128xf32>
    %11 = vector.broadcast %9 : vector<1x128xf32> to vector<8x128xf32>
    %12 = arith.addf %10, %11 : vector<8x128xf32>
    %cst_8 = arith.constant 0.000000e+00 : f32
    %13 = vector.broadcast %cst_8 : f32 to vector<8x128xf32>
    %14 = arith.maximumf %12, %13 : vector<8x128xf32>
    %c176 = arith.constant 176 : index
    %c0_9 = arith.constant 0 : index
    %15 = vector.load %arg2[%c176, %c0_9] : memref<312x128xf32, #tpu.memory_space<vmem>>, vector<128x128xf32>
    %c304 = arith.constant 304 : index
    %c0_10 = arith.constant 0 : index
    %16 = vector.load %arg2[%c304, %c0_10] : memref<312x128xf32, #tpu.memory_space<vmem>>, vector<1x128xf32>
    %cst_11 = arith.constant dense<0.000000e+00> : vector<8x128xf32>
    %17 = tpu.matmul %14, %15, %cst_11 {dimension_numbers = #tpu.dot_dimension_numbers<[1], [0], [0], [1], [0, 0, 1, 1], [], []>} : vector<8x128xf32>, vector<128x128xf32>, vector<8x128xf32> -> vector<8x128xf32>
    %18 = vector.broadcast %16 : vector<1x128xf32> to vector<8x128xf32>
    %19 = arith.addf %17, %18 : vector<8x128xf32>
    %c0_12 = arith.constant 0 : index
    %c0_13 = arith.constant 0 : index
    %20 = vector.load %arg3[%c0_12, %c0_13] : memref<8x128xf32, #tpu.memory_space<vmem>>, vector<8x128xf32>
    tpu.vector_store %arg3[%c0_12, %c0_13], %19 {strides = array<i32>} : memref<8x128xf32, #tpu.memory_space<vmem>>, vector<8x128xf32>,
    return
  }
  func.func @transform_0(%arg0: i32) -> (i32, i32) {
    %c0_i32 = arith.constant 0 : i32
    %c0_i32_0 = arith.constant 0 : i32
    return %arg0, %c0_i32 : i32, i32
  }
  func.func @transform_1(%arg0: i32) -> (i32, i32) {
    %c0_i32 = arith.constant 0 : i32
    %c0_i32_0 = arith.constant 0 : i32
    %c0_i32_1 = arith.constant 0 : i32
    return %c0_i32, %c0_i32_0 : i32, i32
  }
  func.func @transform_2(%arg0: i32) -> (i32, i32) {
    %c0_i32 = arith.constant 0 : i32
    %c0_i32_0 = arith.constant 0 : i32
    return %arg0, %c0_i32 : i32, i32
  }
}

</mosaic_0001>

<llo_original>
// kernel: forward.1
$region0: #{forward.1}
  #allocation0 [shape = 'u32[]', space=smem, size = 0x4, offset = 0x4, fixed_abs, tag = 'smem constant byte address 0x4 - core index']
  #allocation1 [shape = 'u32[72,128]{1,0:T(1,128)}', space=vmem, size = 0x9000, scoped, tag = 'internal scratch']
  %s0 = inlined_call_operand.vmem [shape: f32[8,32], index: 0, kind: input, shape index: {}]
  %s1 = inlined_call_operand.hbm [shape: f32[312,128], index: 1, kind: input, shape index: {}]
  %s2 = inlined_call_operand.vmem [shape: f32[8,128], index: 2, kind: output, shape index: {}]
  %s3 = sld [smem:[#allocation0]]
  $region22: #{forward.1} parent=0
    _
  %s5 = ssub.s32 1, %s3
  %s6 = scalar_select 0, %s5, %s3
  $region1: #{forward.1} parent=0
    #allocation2 [shape = 'u8[159744]{0}', space=vmem, size = 0x27000, scoped, tag = 'input window, operand 1, single buffered']
    #allocation3 [shape = 's32[1]{0}', space=sflag, size = 0x4, scoped, tag = 'scoped memory for forward.1']
    %7 = vsyncpa [#allocation3], 0
    // Predicated region
    $region2: #{forward.1} parent=1 // pred_check
      _
    $region3: #{forward.1} parent=1 // pred_check_branch
      %9 = sbr.rel (0) target = $region5
    $region4: #{forward.1} parent=1 // pred_region
      _
    $region5: #{forward.1} parent=1 // pred_fallthru
      _
    // Predicated region
    $region6: #{forward.1} parent=1 // pred_check
      _
    $region7: #{forward.1} parent=1 // pred_check_branch
      %11 = sbr.rel (0) target = $region9
    $region8: #{forward.1} parent=1 // pred_region
      %13 = vsyncadd [#allocation3], 0
      %s14 = sshll.u32 %s1, 4
      %s15 = int_to_ptr.hbm [resolvable:$true] %s14
      %s16 = sshll.u32 [#allocation2], 4
      %s17 = int_to_ptr.vmem [resolvable:$true] %s16
      %22 = dma.hbm_to_vmem [thread:$0]  %s15, 4992, %s17, [#allocation3], 128, 128, 8
    $region9: #{forward.1} parent=1 // pred_fallthru
      _
    // Predicated region
    $region10: #{forward.1} parent=1 // pred_check
      _
    $region11: #{forward.1} parent=1 // pred_check_branch
      %24 = sbr.rel (0) target = $region13
    $region12: #{forward.1} parent=1 // pred_region
      %26 = dma.done [#allocation3], 4992
    $region13: #{forward.1} parent=1 // pred_fallthru
      _
    %v27 = vld [vmem:[%s0] sm:$0xff]
    %v28 = vld [vmem:[#allocation2] sm:$0xff]
    %v29 = vld [vmem:[#allocation2 + $0x8] sm:$0xff]
    %v30 = vld [vmem:[#allocation2 + $0x10] sm:$0xff]
    %v31 = vld [vmem:[#allocation2 + $0x18] sm:$0xff]
    %v32 = vld [vmem:[#allocation2 + $0x20] sm:$0x1]
    %v33 = vperm.slane %v32, 0
    %vm34 = vcmask 261120
    %v36 = vsel %vm34, %v27, 0
    %38 = vmatpush.msra.mxu0 0.0
    %39 = vmatpush.msra.mxu0 0.0
    %40 = vmatpush.msra.mxu0 0.0
    %41 = vmatpush.msra.mxu0 0.0
    %42 = vmatpush.msra.mxu0 0.0
    %43 = vmatpush.msra.mxu0 0.0
    %44 = vmatpush.msra.mxu0 0.0
    %45 = vmatpush.msra.mxu0 0.0
    %46 = vmatpush.msra.mxu0 0.0
    %47 = vmatpush.msra.mxu0 0.0
    %48 = vmatpush.msra.mxu0 0.0
    %49 = vmatpush.msra.mxu0 0.0
    %50 = vmatpush.msra.mxu0 %v31
    %51 = vmatpush.msra.mxu0 %v30
    %52 = vmatpush.msra.mxu0 %v29
    %53 = vmatpush.msra.mxu0 %v28
    %54 = vmatmul.f32.gmra.mxu0 %v36
    %v55 = vpop.f32.mrf.mxu0
    %v56 = vadd.f32 %v33, %v55
    %57 = vdwg.mxu0
    %v58 = vmax.f32 %v56, 0.0
    %v59 = vld [vmem:[#allocation2 + $0x28] sm:$0xff]
    %v60 = vld [vmem:[#allocation2 + $0x30] sm:$0xff]
    %v61 = vld [vmem:[#allocation2 + $0x38] sm:$0xff]
    %v62 = vld [vmem:[#allocation2 + $0x40] sm:$0xff]
    %v63 = vld [vmem:[#allocation2 + $0x48] sm:$0xff]
    %v64 = vld [vmem:[#allocation2 + $0x50] sm:$0xff]
    %v65 = vld [vmem:[#allocation2 + $0x58] sm:$0xff]
    %v66 = vld [vmem:[#allocation2 + $0x60] sm:$0xff]
    %v67 = vld [vmem:[#allocation2 + $0x68] sm:$0xff]
    %v68 = vld [vmem:[#allocation2 + $0x70] sm:$0xff]
    %v69 = vld [vmem:[#allocation2 + $0x78] sm:$0xff]
    %v70 = vld [vmem:[#allocation2 + $0x80] sm:$0xff]
    %v71 = vld [vmem:[#allocation2 + $0x88] sm:$0xff]
    %v72 = vld [vmem:[#allocation2 + $0x90] sm:$0xff]
    %v73 = vld [vmem:[#allocation2 + $0x98] sm:$0xff]
    %v74 = vld [vmem:[#allocation2 + $0xa0] sm:$0xff]
    %v75 = vld [vmem:[#allocation2 + $0xa8] sm:$0x1]
    %v76 = vperm.slane %v75, 0
    %77 = vmatpush.msra.mxu0 %v74
    %78 = vmatpush.msra.mxu0 %v73
    %79 = vmatpush.msra.mxu0 %v72
    %80 = vmatpush.msra.mxu0 %v71
    %81 = vmatpush.msra.mxu0 %v70
    %82 = vmatpush.msra.mxu0 %v69
    %83 = vmatpush.msra.mxu0 %v68
    %84 = vmatpush.msra.mxu0 %v67
    %85 = vmatpush.msra.mxu0 %v66
    %86 = vmatpush.msra.mxu0 %v65
    %87 = vmatpush.msra.mxu0 %v64
    %88 = vmatpush.msra.mxu0 %v63
    %89 = vmatpush.msra.mxu0 %v62
    %90 = vmatpush.msra.mxu0 %v61
    %91 = vmatpush.msra.mxu0 %v60
    %92 = vmatpush.msra.mxu0 %v59
    %93 = vmatmul.f32.gmra.mxu0 %v58
    %v94 = vpop.f32.mrf.mxu0
    %v95 = vadd.f32 %v76, %v94
    %96 = vdwg.mxu0
    %v97 = vmax.f32 %v95, 0.0
    %v98 = vld [vmem:[#allocation2 + $0xb0] sm:$0xff]
    %v99 = vld [vmem:[#allocation2 + $0xb8] sm:$0xff]
    %v100 = vld [vmem:[#allocation2 + $0xc0] sm:$0xff]
    %v101 = vld [vmem:[#allocation2 + $0xc8] sm:$0xff]
    %v102 = vld [vmem:[#allocation2 + $0xd0] sm:$0xff]
    %v103 = vld [vmem:[#allocation2 + $0xd8] sm:$0xff]
    %v104 = vld [vmem:[#allocation2 + $0xe0] sm:$0xff]
    %v105 = vld [vmem:[#allocation2 + $0xe8] sm:$0xff]
    %v106 = vld [vmem:[#allocation2 + $0xf0] sm:$0xff]
    %v107 = vld [vmem:[#allocation2 + $0xf8] sm:$0xff]
    %v108 = vld [vmem:[#allocation2 + $0x100] sm:$0xff]
    %v109 = vld [vmem:[#allocation2 + $0x108] sm:$0xff]
    %v110 = vld [vmem:[#allocation2 + $0x110] sm:$0xff]
    %v111 = vld [vmem:[#allocation2 + $0x118] sm:$0xff]
    %v112 = vld [vmem:[#allocation2 + $0x120] sm:$0xff]
    %v113 = vld [vmem:[#allocation2 + $0x128] sm:$0xff]
    %v114 = vld [vmem:[#allocation2 + $0x130] sm:$0x1]
    %v115 = vperm.slane %v114, 0
    %116 = vmatpush.msra.mxu0 %v113
    %117 = vmatpush.msra.mxu0 %v112
    %118 = vmatpush.msra.mxu0 %v111
    %119 = vmatpush.msra.mxu0 %v110
    %120 = vmatpush.msra.mxu0 %v109
    %121 = vmatpush.msra.mxu0 %v108
    %122 = vmatpush.msra.mxu0 %v107
    %123 = vmatpush.msra.mxu0 %v106
    %124 = vmatpush.msra.mxu0 %v105
    %125 = vmatpush.msra.mxu0 %v104
    %126 = vmatpush.msra.mxu0 %v103
    %127 = vmatpush.msra.mxu0 %v102
    %128 = vmatpush.msra.mxu0 %v101
    %129 = vmatpush.msra.mxu0 %v100
    %130 = vmatpush.msra.mxu0 %v99
    %131 = vmatpush.msra.mxu0 %v98
    %132 = vmatmul.f32.gmra.mxu0 %v97
    %v133 = vpop.f32.mrf.mxu0
    %v134 = vadd.f32 %v115, %v133
    %135 = vdwg.mxu0
    %136 = vst [vmem:[%s2] sm:$0xff] %v134
    // Predicated region
    $region14: #{forward.1} parent=1 // pred_check
      _
    $region15: #{forward.1} parent=1 // pred_check_branch
      %138 = sbr.rel (0) target = $region17
    $region16: #{forward.1} parent=1 // pred_region
      _
    $region17: #{forward.1} parent=1 // pred_fallthru
      _
    // Predicated region
    $region18: #{forward.1} parent=1 // pred_check
      _
    $region19: #{forward.1} parent=1 // pred_check_branch
      %140 = sbr.rel (0) target = $region21
    $region20: #{forward.1} parent=1 // pred_region
      _
    $region21: #{forward.1} parent=1 // pred_fallthru
      _
    %141 = vsyncpa [#allocation3], 1

</llo_original>
